<compile_context>
chip_gen: v7x
topology: tpu7x:2x2x1
jax: 0.10.0
libtpu: 0.0.40
codegen_flags: <defaults>
</compile_context>

<pallas_src>
import functools

import jax
import jax.numpy as jnp
from jax.experimental import pallas as pl
from jax.experimental.pallas import tpu as pltpu


def _round_up(x, m):
    return ((x + m - 1) // m) * m


def _neg_init(dtype):
    dtype = jnp.dtype(dtype)
    if jnp.issubdtype(dtype, jnp.floating):
        return float("-inf")
    return int(jnp.iinfo(dtype).min)


# ---------------------------------------------------------------------------
# Case 1: HW fits in a single lane tile (nk == 1).  No scratch: each grid step
# reduces its (TM, HW) block straight into the (TM, 2) output.
# ---------------------------------------------------------------------------
def _single_tile_kernel(x_ref, out_ref, *, inv_hw):
    x = x_ref[...]                                            # (TM, HW)
    avg = jnp.sum(x.astype(jnp.float32), axis=-1, keepdims=True) * inv_hw
    mx = jnp.max(x, axis=-1, keepdims=True)
    out_ref[...] = jnp.concatenate(
        [avg.astype(out_ref.dtype), mx.astype(out_ref.dtype)], axis=1
    )


# ---------------------------------------------------------------------------
# Case 2: HW is tiled (nk > 1).  Running accumulators are (TM, 128) only.
# ---------------------------------------------------------------------------
def _multi_tile_kernel(x_ref, out_ref, sum_ref, max_ref, *,
                       inv_hw, tm, tk, hw, row_chunk):
    k = pl.program_id(1)
    nk = pl.num_programs(1)
    nlanes = tk // 128
    neg_in = _neg_init(x_ref.dtype)
    neg_acc = _neg_init(max_ref.dtype)
    has_tail = (hw % tk) != 0

    @pl.when(k == 0)
    def _init():
        sum_ref[...] = jnp.zeros(sum_ref.shape, sum_ref.dtype)
        max_ref[...] = jnp.full(max_ref.shape, neg_acc, max_ref.dtype)

    def accumulate(masked):
        base = k * tk
        for r in range(0, tm, row_chunk):
            rs = min(row_chunk, tm - r)

            def load(j, rs=rs, r=r):
                xj = x_ref[r:r + rs, j * 128:(j + 1) * 128]   # (rs, 128)
                if masked:
                    col = base + j * 128 + jax.lax.broadcasted_iota(
                        jnp.int32, (rs, 128), 1)
                    valid = col < hw
                    return (jnp.where(valid, xj.astype(jnp.float32), 0.0),
                            jnp.where(valid, xj, neg_in))
                return xj.astype(jnp.float32), xj

            # vreg-resident partials over the tile's lanes (pure VPU add/max)
            s, m = load(0)
            for j in range(1, nlanes):
                xs, xm = load(j)
                s = s + xs
                m = jnp.maximum(m, xm)
            # one (rs, 128) scratch read-modify-write per row chunk
            sum_ref[r:r + rs, :] = sum_ref[r:r + rs, :] + s
            max_ref[r:r + rs, :] = jnp.maximum(
                max_ref[r:r + rs, :], m.astype(max_ref.dtype))

    if has_tail:
        @pl.when(k == nk - 1)
        def _tail():
            accumulate(True)

        @pl.when(k != nk - 1)
        def _body():
            accumulate(False)
    else:
        accumulate(False)

    @pl.when(k == nk - 1)
    def _finalize():
        avg = jnp.sum(sum_ref[...], axis=-1, keepdims=True) * inv_hw
        mx = jnp.max(max_ref[...], axis=-1, keepdims=True)
        out_ref[...] = jnp.concatenate(
            [avg.astype(out_ref.dtype), mx.astype(out_ref.dtype)], axis=1
        )


def adaptive_concat_pool2d(x, *, tm_max=256, tk_max=4096):
    """x: (N, C, H, W) -> (N, 2*C, 1, 1); channels [0:C] = avg pool, [C:2C] = max pool."""
    N, C, H, W = x.shape
    NC, HW = N * C, H * W
    dtype = x.dtype
    itemsize = jnp.dtype(dtype).itemsize
    sub = {1: 32, 2: 16}.get(itemsize, 8)          # min sublane multiple per dtype

    x2 = x.reshape(NC, HW)                         # rows = N*C, lanes = H*W

    # ---- row (N*C) tiling: >= 2 row tiles when possible (v7x megacore) ----
    if NC <= sub:
        TM = NC                                    # single full-extent block
    else:
        half = _round_up(-(-NC // 2), sub)         # aim for >= 2 row tiles
        cap = max(sub, (tm_max // sub) * sub)
        TM = min(half, cap)
    nm = pl.cdiv(NC, TM)

    # ---- HW (reduction) tiling: no wrapper padding; ragged tail masked in-kernel ----
    if HW <= tk_max:
        TK, nk = HW, 1
    else:
        TK = max(128, (tk_max // 128) * 128)
        nk = pl.cdiv(HW, TK)

    # Exact max path; f32 max accumulator for floats (superset; avoids bf16 VPU
    # pack/unpack on v5e), input dtype for integers.
    max_acc_dtype = jnp.float32 if jnp.issubdtype(dtype, jnp.floating) else dtype
    acc_itemsize = jnp.dtype(max_acc_dtype).itemsize

    cost = pl.CostEstimate(
        flops=2 * NC * HW,
        transcendentals=0,
        bytes_accessed=NC * HW * itemsize + NC * 2 * itemsize,
    )

    in_block_bytes = TM * TK * itemsize
    scratch_bytes = TM * 128 * (4 + acc_itemsize) if nk > 1 else 0
    vmem_need = 2 * in_block_bytes + scratch_bytes + 2 * TM * 2 * itemsize + (1 << 20)
    vmem_limit = int(min(max(vmem_need, 16 << 20), 32 << 20))  # safe on v5e/v6e/v7x

    if nk == 1:
        out = pl.pallas_call(
            functools.partial(_single_tile_kernel, inv_hw=1.0 / HW),
            out_shape=jax.ShapeDtypeStruct((NC, 2), dtype),
            grid_spec=pltpu.PrefetchScalarGridSpec(
                num_scalar_prefetch=0,
                grid=(nm,),
                in_specs=[pl.BlockSpec((TM, TK), lambda i: (i, 0))],
                out_specs=pl.BlockSpec((TM, 2), lambda i: (i, 0)),
            ),
            compiler_params=pltpu.CompilerParams(
                dimension_semantics=("parallel",),
                vmem_limit_bytes=vmem_limit,
            ),
            cost_estimate=cost,
        )(x2)
    else:
        row_chunk = min(TM, 4 * sub)
        kernel = functools.partial(
            _multi_tile_kernel,
            inv_hw=1.0 / HW, tm=TM, tk=TK, hw=HW, row_chunk=row_chunk)
        out = pl.pallas_call(
            kernel,
            out_shape=jax.ShapeDtypeStruct((NC, 2), dtype),
            grid_spec=pltpu.PrefetchScalarGridSpec(
                num_scalar_prefetch=0,
                grid=(nm, nk),
                in_specs=[pl.BlockSpec((TM, TK), lambda i, k: (i, k))],
                out_specs=pl.BlockSpec((TM, 2), lambda i, k: (i, 0)),
                scratch_shapes=[
                    pltpu.VMEM((TM, 128), jnp.float32),     # running sums (f32)
                    pltpu.VMEM((TM, 128), max_acc_dtype),   # running maxes
                ],
            ),
            compiler_params=pltpu.CompilerParams(
                dimension_semantics=("parallel", "arbitrary"),
                vmem_limit_bytes=vmem_limit,
            ),
            cost_estimate=cost,
        )(x2)

    # (NC, 2) -> (N, C, 2) -> (N, 2, C) -> (N, 2*C, 1, 1)
    out = out.reshape(N, C, 2)
    out = jnp.transpose(out, (0, 2, 1)).reshape(N, 2 * C, 1, 1)
    return out


def _reference(x):
    return jnp.concatenate(
        [jnp.mean(x, axis=(2, 3), keepdims=True),
         jnp.max(x, axis=(2, 3), keepdims=True)],
        axis=1,
    )


if __name__ == "__main__":
    key = jax.random.PRNGKey(0)
    k1, k2, k3, k4 = jax.random.split(key, 4)

    # Primary: module-implied small shape (batch=2, channels=4, spatial=16).
    x = jax.random.normal(k1, (2, 4, 16, 16), dtype=jnp.float32)
    out = adaptive_concat_pool2d(x)
    jax.block_until_ready(out)
    assert out.shape == (2, 8, 1, 1)
    assert jnp.allclose(out, _reference(x), atol=1e-5, rtol=1e-5)

    # Row tiling + HW tiling with a ragged HW tail (in-kernel masking path).
    x2 = jax.random.normal(k2, (2, 8, 10, 20), dtype=jnp.float32)   # NC=16, HW=200
    out2 = adaptive_concat_pool2d(x2, tm_max=8, tk_max=128)
    jax.block_until_ready(out2)
    assert out2.shape == (2, 16, 1, 1)
    assert jnp.allclose(out2, _reference(x2), atol=1e-5, rtol=1e-5)

    # HW tiling with an aligned tail (no masking, multi-tile accumulate path).
    x3 = jax.random.normal(k3, (1, 8, 16, 16), dtype=jnp.float32)   # NC=8, HW=256
    out3 = adaptive_concat_pool2d(x3, tk_max=128)
    jax.block_until_ready(out3)
    assert out3.shape == (1, 16, 1, 1)
    assert jnp.allclose(out3, _reference(x3), atol=1e-5, rtol=1e-5)

    # Ragged row tail (NC=9 not a sublane multiple), single HW tile.
    x4 = jax.random.normal(k4, (3, 3, 4, 4), dtype=jnp.float32)     # NC=9, HW=16
    out4 = adaptive_concat_pool2d(x4)
    jax.block_until_ready(out4)
    assert out4.shape == (3, 6, 1, 1)
    assert jnp.allclose(out4, _reference(x4), atol=1e-5, rtol=1e-5)

    print("KERNEL_OK")
</pallas_src>

<mosaic_0001>
module attributes {stable_mosaic.version = 11 : i64} {
  func.func @_single_tile_kernel(%arg0: i32, %arg1: memref<8x256xf32, #tpu.memory_space<vmem>>, %arg2: memref<8x2xf32, #tpu.memory_space<vmem>>) attributes {dimension_semantics = [#tpu.dimension_semantics<parallel>], iteration_bounds = array<i64: 1>, scalar_prefetch = 0 : i64, scratch_operands = 0 : i64, tpu.core_type = #tpu.core_type<tc>, window_params = [{transform_indices = @transform_0, window_bounds = array<i64: 8, 256>}, {transform_indices = @transform_1, window_bounds = array<i64: 8, 2>}]} {
    %c0 = arith.constant 0 : index
    %c0_0 = arith.constant 0 : index
    %0 = vector.load %arg1[%c0, %c0_0] : memref<8x256xf32, #tpu.memory_space<vmem>>, vector<8x256xf32>
    %cst = arith.constant dense<0.000000e+00> : vector<8xf32>
    %1 = vector.multi_reduction <add>, %0, %cst [1] : vector<8x256xf32> to vector<8xf32>
    %2 = vector.shape_cast %1 : vector<8xf32> to vector<8x1xf32>
    %cst_1 = arith.constant 3.906250e-03 : f32
    %3 = vector.broadcast %cst_1 : f32 to vector<8x1xf32>
    %4 = arith.mulf %2, %3 : vector<8x1xf32>
    %cst_2 = arith.constant dense<0xFF800000> : vector<8xf32>
    %5 = vector.multi_reduction <maximumf>, %0, %cst_2 [1] : vector<8x256xf32> to vector<8xf32>
    %6 = vector.shape_cast %5 : vector<8xf32> to vector<8x1xf32>
    %7 = tpu.concatenate %4, %6 in 1 : vector<8x1xf32>, vector<8x1xf32> -> vector<8x2xf32>
    %c0_3 = arith.constant 0 : index
    %c0_4 = arith.constant 0 : index
    %8 = vector.load %arg2[%c0_3, %c0_4] : memref<8x2xf32, #tpu.memory_space<vmem>>, vector<8x2xf32>
    tpu.vector_store %arg2[%c0_3, %c0_4], %7 {strides = array<i32>} : memref<8x2xf32, #tpu.memory_space<vmem>>, vector<8x2xf32>,
    return
  }
  func.func @transform_0(%arg0: i32) -> (i32, i32) {
    %c0_i32 = arith.constant 0 : i32
    %c0_i32_0 = arith.constant 0 : i32
    return %arg0, %c0_i32 : i32, i32
  }
  func.func @transform_1(%arg0: i32) -> (i32, i32) {
    %c0_i32 = arith.constant 0 : i32
    %c0_i32_0 = arith.constant 0 : i32
    return %arg0, %c0_i32 : i32, i32
  }
}

</mosaic_0001>

<llo_original>
// kernel: tpu_custom_call.1
$region0: #{tpu_custom_call.1}
  #allocation0 [shape = 'u32[]', space=smem, size = 0x4, offset = 0x4, fixed_abs, tag = 'smem constant byte address 0x4 - core index']
  #allocation1 [shape = 'u32[144,128]{1,0:T(1,128)}', space=vmem, size = 0x12000, scoped, tag = 'internal scratch']
  %s0 = inlined_call_operand.hbm [shape: f32[8,256], index: 0, kind: input, shape index: {}]
  %s1 = inlined_call_operand.vmem [shape: f32[8,2], index: 1, kind: output, shape index: {}]
  %s2 = sld [smem:[#allocation0]]
  $region18: #{tpu_custom_call.1} parent=0
    _
  %s4 = ssub.s32 1, %s2
  %s5 = scalar_select 0, %s4, %s2
  $region1: #{tpu_custom_call.1} parent=0
    #allocation2 [shape = 'u8[8192]{0}', space=vmem, size = 0x2000, scoped, tag = 'input window, operand 0, single buffered']
    #allocation3 [shape = 's32[1]{0}', space=sflag, size = 0x4, scoped, tag = 'scoped memory for tpu_custom_call.1']
    %6 = vsyncpa [#allocation3], 0
    // Predicated region
    $region2: #{tpu_custom_call.1} parent=1 // pred_check
      _
    $region3: #{tpu_custom_call.1} parent=1 // pred_check_branch
      %8 = sbr.rel (0) target = $region5
    $region4: #{tpu_custom_call.1} parent=1 // pred_region
      %s10 = ssub.s32 256, 256
      %11 = vsyncadd [#allocation3], %s10
      %s13 = sshll.u32 [#allocation2], 4
      %s14 = int_to_ptr.vmem [resolvable:$true] %s13
      %16 = dma.hbm_to_vmem [thread:$0]  %s0, 256, %s14, [#allocation3]
    $region5: #{tpu_custom_call.1} parent=1 // pred_fallthru
      _
    // Predicated region
    $region6: #{tpu_custom_call.1} parent=1 // pred_check
      _
    $region7: #{tpu_custom_call.1} parent=1 // pred_check_branch
      %18 = sbr.rel (0) target = $region9
    $region8: #{tpu_custom_call.1} parent=1 // pred_region
      %19 = dma.done [#allocation3], 256
    $region9: #{tpu_custom_call.1} parent=1 // pred_fallthru
      _
    %v20 = vld [vmem:[#allocation2] sm:$0xff]
    %v21 = vld [vmem:[#allocation2 + $0x8] sm:$0xff]
    %v22 = vadd.f32 %v20, %v21
    %23 = vadd.xlane.f32.xlu0 %v22
    %v24 = vpop.xlane.xlu0 %23
    %v25 = vmul.f32 %v24, 0.00390625
    %v26 = vmax.f32 %v20, %v21
    %27 = vmax.xlane.f32.xlu0 %v26
    %v28 = vpop.xlane.xlu0 %27
    %vm29 = vcmask 7168
    %v30 = vsel %vm29, %v25, %v28
    %vm31 = vcmask 15360
    %32 = vst.msk [vmem:[%s1] sm:$0xff] %vm31, %v30
    // Predicated region
    $region10: #{tpu_custom_call.1} parent=1 // pred_check
      _
    $region11: #{tpu_custom_call.1} parent=1 // pred_check_branch
      %34 = sbr.rel (0) target = $region13
    $region12: #{tpu_custom_call.1} parent=1 // pred_region
      _
    $region13: #{tpu_custom_call.1} parent=1 // pred_fallthru
      _
    // Predicated region
    $region14: #{tpu_custom_call.1} parent=1 // pred_check
      _
    $region15: #{tpu_custom_call.1} parent=1 // pred_check_branch
      %36 = sbr.rel (0) target = $region17
    $region16: #{tpu_custom_call.1} parent=1 // pred_region
      _
    $region17: #{tpu_custom_call.1} parent=1 // pred_fallthru
      _
    %37 = vsyncpa [#allocation3], 1

</llo_original>
